<compile_context>
chip_gen: v6e
topology: v6e:2x2x1
jax: 0.10.0
libtpu: 0.0.40
codegen_flags: <defaults>
</compile_context>

<pallas_src>
import functools
import math

import jax
import jax.numpy as jnp
from jax.experimental import pallas as pl
from jax.experimental.pallas import tpu as pltpu


_VMEM_LIMIT = 32 * 1024 * 1024        # <= default scoped limit on v6e/v7x, raises v5e's 16 MiB
_TARGET_TILE_BYTES = 2 * 1024 * 1024  # ~2 MiB f32 working set per grid step (mem-bound sweet spot)
_LANES = 128                          # one vreg lane-row -> in-vreg rolls


def _cdiv(a, b):
    return -(-a // b)


def _round_down8(n):
    return (n // 8) * 8


def _choose_block_rows(rows, w):
    """Rows per grid step for a (rows, w) slab.

    Budget is the *f32* working set (~2 MiB) regardless of the input dtype,
    and the step count is nudged to an even number so a v7x chip can split the
    "parallel" grid axis evenly across its two TensorCores.
    """
    if rows < 16:
        return rows                               # single step, block == full extent
    cap = max(8, _round_down8(_TARGET_TILE_BYTES // (w * 4)))
    bn = max(8, _round_down8(min(cap, rows)))
    steps = _cdiv(rows, bn)
    if steps % 2 == 1:
        bn_even = max(8, ((_cdiv(rows, steps + 1) + 7) // 8) * 8)
        if _cdiv(rows, bn_even) % 2 == 0:
            bn = bn_even
    return bn


# ---------------------------------------------------------------------------
# Fast path: lane-dense kernel (power-of-two group size, W = 128 lanes).
# ---------------------------------------------------------------------------
def _simnorm_lane_kernel(x_ref, o_ref, *, group_dim):
    # x_ref / o_ref: (block_n, 128) in VMEM.  Groups are aligned, contiguous
    # runs of `group_dim` lanes (group_dim == 2**k divides 128), so every
    # pltpu.roll below is a single in-vreg lane rotation.
    xf = x_ref[...].astype(jnp.float32)
    bn, w = xf.shape

    # (1, w) lane-bit masks: broadcast inside the selects instead of
    # materializing (block_n, w) int/bool temporaries on every grid step.
    lane = jax.lax.broadcasted_iota(jnp.int32, (1, w), 1)
    shifts = []
    s = 1
    while s < group_dim:
        shifts.append(s)
        s *= 2
    masks = [(lane & s) != 0 for s in shifts]     # bit `s` of the lane index

    def seg_allreduce(v, op):
        # XOR-butterfly all-reduce within each aligned group of `group_dim`
        # lanes: after log2(group_dim) steps every lane holds its group's
        # reduction.  partner(lane) = lane XOR s, fetched via two lane
        # rotations (roll semantics: roll(v, k)[i] == v[i - k]); the select
        # never consumes wrapped-around lanes for aligned power-of-two groups.
        for s, bit_set in zip(shifts, masks):
            minus = pltpu.roll(v, s, axis=1)       # v[lane - s]
            plus = pltpu.roll(v, w - s, axis=1)    # v[lane + s]
            v = op(v, jnp.where(bit_set, minus, plus))
        return v

    m = seg_allreduce(xf, jnp.maximum)             # per-group max on every lane
    e = jnp.exp(xf - m)
    denom = seg_allreduce(e, jnp.add)              # per-group sum on every lane
    inv = pl.reciprocal(denom, approx=True)        # EUP vrcp (free slot)
    inv = inv * (2.0 - denom * inv)                # one Newton step -> ~exact
    o_ref[...] = (e * inv).astype(o_ref.dtype)


# ---------------------------------------------------------------------------
# Fallback: reshape-based kernel (ragged total or non-power-of-two group).
# ---------------------------------------------------------------------------
def _simnorm_reshape_kernel(x_ref, o_ref, *, group_dim):
    x = x_ref[...].astype(jnp.float32)
    bn, h = x.shape
    xg = x.reshape(bn, h // group_dim, group_dim)
    m = jnp.max(xg, axis=-1, keepdims=True)
    e = jnp.exp(xg - m)
    denom = jnp.sum(e, axis=-1, keepdims=True)
    o_ref[...] = (e / denom).reshape(bn, h).astype(o_ref.dtype)


def _simnorm_fallback(x2, group_dim):
    n, h = x2.shape
    # Cap the f32 working set per tile (~2 MiB); block_n must be a multiple of
    # 8 or equal the full row extent.  (For pathologically huge h a single
    # 8-row block could still exceed VMEM; lane-axis tiling is not needed for
    # realistic SimNorm hidden sizes.)
    cap = max(8, _round_down8(_TARGET_TILE_BYTES // (max(h, 1) * 4)))
    block_n = n if n <= cap else cap
    grid = (_cdiv(n, block_n),)
    kernel = functools.partial(_simnorm_reshape_kernel, group_dim=group_dim)
    return pl.pallas_call(
        kernel,
        out_shape=jax.ShapeDtypeStruct((n, h), x2.dtype),
        grid=grid,
        in_specs=[pl.BlockSpec((block_n, h), lambda i: (i, 0))],
        out_specs=pl.BlockSpec((block_n, h), lambda i: (i, 0)),
        compiler_params=pltpu.CompilerParams(
            dimension_semantics=("parallel",),
            vmem_limit_bytes=_VMEM_LIMIT),
    )(x2)


def simnorm(x, simnorm_dim):
    """Apply SimNorm (softmax over groups of `simnorm_dim`) on the last axis."""
    shp = x.shape
    d = int(simnorm_dim)
    h = shp[-1]
    if d <= 0 or h % d != 0:
        raise ValueError("last dim must be divisible by simnorm_dim")
    total = math.prod(shp)
    if total == 0:
        return x

    is_pow2 = (d & (d - 1)) == 0
    if is_pow2 and d <= _LANES and total % _LANES == 0:
        # ---- lane-dense flat path (no pad, no slice: reshape is free) ------
        w = _LANES
        rows = total // w
        x2 = x.reshape(rows, w)
        block_n = _choose_block_rows(rows, w)
        grid = (_cdiv(rows, block_n),)
        n_steps = max((d - 1).bit_length(), 0)     # log2(d) butterfly steps

        kernel = functools.partial(_simnorm_lane_kernel, group_dim=d)
        out2 = pl.pallas_call(
            kernel,
            out_shape=jax.ShapeDtypeStruct((rows, w), x.dtype),
            grid=grid,
            in_specs=[pl.BlockSpec((block_n, w), lambda i: (i, 0))],
            out_specs=pl.BlockSpec((block_n, w), lambda i: (i, 0)),
            compiler_params=pltpu.CompilerParams(
                dimension_semantics=("parallel",),
                vmem_limit_bytes=_VMEM_LIMIT),
            cost_estimate=pl.CostEstimate(
                flops=total * (4 * n_steps + 8),
                transcendentals=2 * total,          # exp + reciprocal
                bytes_accessed=2 * total * x.dtype.itemsize),
        )(x2)
        return out2.reshape(shp)

    # Ragged (total % 128 != 0, typically tiny tensors) or non-power-of-two
    # group size: natural (N, h) slab, reshape-based softmax.
    return _simnorm_fallback(x.reshape(total // h, h), d).reshape(shp)


def _simnorm_ref(x, simnorm_dim):
    shp = x.shape
    xg = x.reshape(*shp[:-1], -1, simnorm_dim)
    sm = jax.nn.softmax(xg.astype(jnp.float32), axis=-1).astype(x.dtype)
    return sm.reshape(shp)


if __name__ == "__main__":
    simnorm_dim = 8
    k1, k2 = jax.random.split(jax.random.PRNGKey(0))

    # Small shape implied by the module: (batch=2, hidden=32) -> 4 groups of 8.
    # total=64 is not a multiple of 128, so this exercises the fallback path.
    x1 = jax.random.normal(k1, (2, 32), dtype=jnp.float32)
    out1 = simnorm(x1, simnorm_dim)
    jax.block_until_ready(out1)
    ref1 = _simnorm_ref(x1, simnorm_dim)
    assert out1.shape == x1.shape
    assert jnp.allclose(out1, ref1, atol=1e-5, rtol=1e-5), "mismatch (fallback)"

    # Slightly larger shape exercising the lane-dense W=128 tiled path (+ jit).
    x2 = 4.0 * jax.random.normal(k2, (4, 8, 512), dtype=jnp.float32)
    simnorm_jit = jax.jit(simnorm, static_argnums=1)
    out2 = simnorm_jit(x2, simnorm_dim)
    jax.block_until_ready(out2)
    ref2 = _simnorm_ref(x2, simnorm_dim)
    assert out2.shape == x2.shape
    assert jnp.allclose(out2, ref2, atol=1e-5, rtol=1e-5), "mismatch (lane path)"

    print("KERNEL_OK")
</pallas_src>

<mosaic_0001>
module attributes {stable_mosaic.version = 11 : i64} {
  func.func @_simnorm_reshape_kernel(%arg0: i32, %arg1: memref<2x32xf32, #tpu.memory_space<vmem>>, %arg2: memref<2x32xf32, #tpu.memory_space<vmem>>) attributes {dimension_semantics = [#tpu.dimension_semantics<parallel>], iteration_bounds = array<i64: 1>, scalar_prefetch = 0 : i64, scratch_operands = 0 : i64, tpu.core_type = #tpu.core_type<tc>, window_params = [{transform_indices = @transform_0, window_bounds = array<i64: 2, 32>}, {transform_indices = @transform_1, window_bounds = array<i64: 2, 32>}]} {
    %c0 = arith.constant 0 : index
    %c0_0 = arith.constant 0 : index
    %0 = vector.load %arg1[%c0, %c0_0] : memref<2x32xf32, #tpu.memory_space<vmem>>, vector<2x32xf32>
    %1 = vector.shape_cast %0 : vector<2x32xf32> to vector<2x4x8xf32>
    %cst = arith.constant dense<0xFF800000> : vector<2x4xf32>
    %2 = vector.multi_reduction <maximumf>, %1, %cst [2] : vector<2x4x8xf32> to vector<2x4xf32>
    %3 = vector.shape_cast %2 : vector<2x4xf32> to vector<2x4x1xf32>
    %4 = vector.broadcast %3 : vector<2x4x1xf32> to vector<2x4x8xf32>
    %5 = arith.subf %1, %4 : vector<2x4x8xf32>
    %6 = math.exp %5 : vector<2x4x8xf32>
    %cst_1 = arith.constant dense<0.000000e+00> : vector<2x4xf32>
    %7 = vector.multi_reduction <add>, %6, %cst_1 [2] : vector<2x4x8xf32> to vector<2x4xf32>
    %8 = vector.shape_cast %7 : vector<2x4xf32> to vector<2x4x1xf32>
    %9 = vector.broadcast %8 : vector<2x4x1xf32> to vector<2x4x8xf32>
    %10 = arith.divf %6, %9 : vector<2x4x8xf32>
    %11 = vector.shape_cast %10 : vector<2x4x8xf32> to vector<2x32xf32>
    %c0_2 = arith.constant 0 : index
    %c0_3 = arith.constant 0 : index
    %12 = vector.load %arg2[%c0_2, %c0_3] : memref<2x32xf32, #tpu.memory_space<vmem>>, vector<2x32xf32>
    tpu.vector_store %arg2[%c0_2, %c0_3], %11 {strides = array<i32>} : memref<2x32xf32, #tpu.memory_space<vmem>>, vector<2x32xf32>,
    return
  }
  func.func @transform_0(%arg0: i32) -> (i32, i32) {
    %c0_i32 = arith.constant 0 : i32
    %c0_i32_0 = arith.constant 0 : i32
    return %arg0, %c0_i32 : i32, i32
  }
  func.func @transform_1(%arg0: i32) -> (i32, i32) {
    %c0_i32 = arith.constant 0 : i32
    %c0_i32_0 = arith.constant 0 : i32
    return %arg0, %c0_i32 : i32, i32
  }
}

</mosaic_0001>

<llo_original>
// kernel: tpu_custom_call.1
$region0: #{tpu_custom_call.1}
  #allocation0 [shape = 'u32[]', space=smem, size = 0x4, offset = 0x4, fixed_abs, tag = 'smem constant byte address 0x4 - core index']
  #allocation1 [shape = 'u32[144,128]{1,0:T(1,128)}', space=vmem, size = 0x12000, scoped, tag = 'internal scratch']
  %s0 = inlined_call_operand.hbm [shape: f32[2,32], index: 0, kind: input, shape index: {}]
  %s1 = inlined_call_operand.hbm [shape: f32[2,32], index: 1, kind: output, shape index: {}]
  %s2 = sld [smem:[#allocation0]]
  $region18: #{tpu_custom_call.1} parent=0
    _
  %s4 = ssub.s32 1, %s2
  %s5 = scalar_select 0, %s4, %s2
  $region1: #{tpu_custom_call.1} parent=0
    #allocation2 [shape = 'u8[1024]{0}', space=vmem, size = 0x400, scoped, tag = 'input window, operand 0, single buffered']
    #allocation3 [shape = 's32[1]{0}', space=sflag, size = 0x4, scoped, tag = 'scoped memory for tpu_custom_call.1']
    #allocation4 [shape = 's32[1]{0}', space=sflag, size = 0x4, scoped, tag = 'scoped memory for tpu_custom_call.1']
    #allocation5 [shape = 'u8[1024]{0}', space=vmem, size = 0x400, scoped, tag = 'output window, operand 0, single buffered']
    %6 = vsyncpa [#allocation3], 0
    %7 = vsyncpa [#allocation4], 0
    // Predicated region
    $region2: #{tpu_custom_call.1} parent=1 // pred_check
      _
    $region3: #{tpu_custom_call.1} parent=1 // pred_check_branch
      %9 = sbr.rel (0) target = $region5
    $region4: #{tpu_custom_call.1} parent=1 // pred_region
      %s11 = ssub.s32 32, 32
      %12 = vsyncadd [#allocation3], %s11
      %s14 = sshll.u32 [#allocation2], 4
      %s15 = int_to_ptr.vmem [resolvable:$true] %s14
      %17 = dma.hbm_to_vmem [thread:$0]  %s0, 32, %s15, [#allocation3]
    $region5: #{tpu_custom_call.1} parent=1 // pred_fallthru
      _
    // Predicated region
    $region6: #{tpu_custom_call.1} parent=1 // pred_check
      _
    $region7: #{tpu_custom_call.1} parent=1 // pred_check_branch
      %19 = sbr.rel (0) target = $region9
    $region8: #{tpu_custom_call.1} parent=1 // pred_region
      %20 = dma.done [#allocation3], 32
    $region9: #{tpu_custom_call.1} parent=1 // pred_fallthru
      _
    %v21 = vld [vmem:[#allocation2] sm:$0x3]
    %23 = vrot.lane.b32.xlu0 %v21, 120
    %v24 = vpop.permute.xlu0 %23
    %26 = vrot.lane.b32.xlu0 %v21, 112
    %v27 = vpop.permute.xlu0 %26
    %29 = vrot.lane.b32.xlu0 %v21, 104
    %v30 = vpop.permute.xlu0 %29
    %v32 = vcombine.low %v21, %v27
    %v34 = vunpack.c.l.s4 1983009808
    %v35 = vunpack.c.0.s8 %v34
    %v36 = vlaneseq
    %v37 = vshrl.u32 %v36, 7
    %v38 = vsub.s32 %v35, %v37
    %v39 = vrot.slane %v32, %v38
    %v40 = vcombine.low %v24, %v30
    %v42 = vunpack.c.l.s4 1983009808
    %v43 = vunpack.c.0.s8 %v42
    %v44 = vlaneseq
    %v45 = vshrl.u32 %v44, 7
    %v46 = vsub.s32 %v43, %v45
    %v47 = vrot.slane %v40, %v46
    %v48 = vcombine.low %v39, %v47
    %v50 = vunpack.c.l.s4 1934713408
    %v51 = vunpack.c.0.s8 %v50
    %v52 = vlaneseq
    %v53 = vshrl.u32 %v52, 7
    %v54 = vsub.s32 %v51, %v53
    %v55 = vrot.slane %v48, %v54
    %v56 = vcombine.high %v55, 0.0
    %vm57 = vcmask 60416
    %v58 = vsel %vm57, %v55, -inf
    %59 = vmax.xlane.f32.xlu0 %v58
    %v60 = vpop.xlane.xlu0 %59
    %v61 = vsel %vm57, %v56, -inf
    %62 = vmax.xlane.f32.xlu0 %v61
    %v63 = vpop.xlane.xlu0 %62
    %v64 = vsub.f32 %v55, %v60
    %v65 = vsub.f32 %v56, %v63
    %v66 = vmul.f32 %v64, 1.442695
    %v67 = vpow.pop %v66
    %v68 = vmul.f32 %v65, 1.442695
    %v69 = vpow.pop %v68
    %v70 = vsel %vm57, %v67, 0.0
    %71 = vadd.xlane.f32.xlu0 %v70
    %v72 = vpop.xlane.xlu0 %71
    %v73 = vsel %vm57, %v69, 0.0
    %74 = vadd.xlane.f32.xlu0 %v73
    %v75 = vpop.xlane.xlu0 %74
    %v76 = vrcp.pop %v72
    %v77 = vmul.f32 %v67, %v76
    %v79 = vunpack.c.l.s4 1983009808
    %v80 = vunpack.c.0.s8 %v79
    %v81 = vlaneseq
    %v82 = vshrl.u32 %v81, 7
    %v83 = vsub.s32 %v80, %v82
    %v84 = vrot.slane %v77, %v83
    %v85 = vrcp.pop %v75
    %v86 = vmul.f32 %v69, %v85
    %v88 = vunpack.c.l.s4 1983009808
    %v89 = vunpack.c.0.s8 %v88
    %v90 = vlaneseq
    %v91 = vshrl.u32 %v90, 7
    %v92 = vsub.s32 %v89, %v91
    %v93 = vrot.slane %v86, %v92
    %v94 = vcombine.low %v84, %v93
    %v95 = vcombine.high %v84, %v93
    %v97 = vunpack.c.l.s4 1934713408
    %v98 = vunpack.c.0.s8 %v97
    %v99 = vlaneseq
    %v100 = vshrl.u32 %v99, 7
    %v101 = vsub.s32 %v98, %v100
    %v102 = vrot.slane %v94, %v101
    %v104 = vunpack.c.l.s4 1934713408
    %v105 = vunpack.c.0.s8 %v104
    %v106 = vlaneseq
    %v107 = vshrl.u32 %v106, 7
    %v108 = vsub.s32 %v105, %v107
    %v109 = vrot.slane %v95, %v108
    %v110 = vcombine.high %v102, 0.0
    %v111 = vcombine.high %v109, 0.0
    %113 = vrot.lane.b32.xlu0 %v110, 8
    %v114 = vpop.permute.xlu0 %113
    %117 = vrot.lane.b32.xlu0 %v109, 16
    %v118 = vpop.permute.xlu0 %117
    %121 = vrot.lane.b32.xlu0 %v111, 24
    %v122 = vpop.permute.xlu0 %121
    %vm124 = vcmask 64512
    %v125 = vsel %vm124, %v102, %v114
    %vm126 = vcmask 130048
    %v127 = vsel %vm126, %v125, %v118
    %vm128 = vcmask 195584
    %v129 = vsel %vm128, %v127, %v122
    %vm130 = vcmask 254976
    %131 = vst.msk [vmem:[#allocation5] sm:$0x3] %vm130, %v129
    // Predicated region
    $region10: #{tpu_custom_call.1} parent=1 // pred_check
      _
    $region11: #{tpu_custom_call.1} parent=1 // pred_check_branch
      %133 = sbr.rel (0) target = $region13
    $region12: #{tpu_custom_call.1} parent=1 // pred_region
      %s135 = ssub.s32 32, 32
      %136 = vsyncadd [#allocation4], %s135
      %s138 = sshll.u32 [#allocation5], 4
      %s139 = int_to_ptr.vmem [resolvable:$true] %s138
      %141 = dma.vmem_to_hbm [thread:$0]  %s139, 32, %s1, [#allocation4]
    $region13: #{tpu_custom_call.1} parent=1 // pred_fallthru
      _
    // Predicated region
    $region14: #{tpu_custom_call.1} parent=1 // pred_check
      _
    $region15: #{tpu_custom_call.1} parent=1 // pred_check_branch
      %143 = sbr.rel (0) target = $region17
    $region16: #{tpu_custom_call.1} parent=1 // pred_region
      %144 = dma.done [#allocation4], 32
    $region17: #{tpu_custom_call.1} parent=1 // pred_fallthru
      _
    %145 = vsyncpa [#allocation3], 1
    %146 = vsyncpa [#allocation4], 1

</llo_original>
